<compile_context>
chip_gen: v7x
topology: tpu7x:2x2x1
jax: 0.10.0
libtpu: 0.0.40
codegen_flags: <defaults>
</compile_context>

<pallas_src>
import jax
import jax.numpy as jnp
from jax.experimental import pallas as pl
from jax.experimental.pallas import tpu as pltpu


def _round_up(v, m):
    return (v + m - 1) // m * m


def _pad2d(a, rows, cols, dtype):
    """Cast + zero-pad a 2-D array to (rows, cols); skips copies when already OK."""
    if a.dtype != dtype:
        a = a.astype(dtype)
    if a.shape == (rows, cols):
        return a
    return jnp.zeros((rows, cols), dtype).at[: a.shape[0], : a.shape[1]].set(a)


# ----------------------------------------------------------------------------
# Kernels
# ----------------------------------------------------------------------------
def _kernel_acc_in_out(x_ref, w_ref, p_ref, o_ref):
    """f32 output: accumulate directly into the resident output tile."""
    k = pl.program_id(2)

    @pl.when(k == 0)
    def _():
        o_ref[...] = jnp.zeros_like(o_ref)

    o_ref[...] += jnp.dot(x_ref[...], w_ref[...], preferred_element_type=jnp.float32)

    @pl.when(k == pl.num_programs(2) - 1)
    def _():
        y = o_ref[...] + p_ref[0:1, :]        # bias add
        y = jnp.maximum(y, p_ref[1:2, :])     # torch.clamp_min
        o_ref[...] = jnp.minimum(y, p_ref[2:3, :])  # torch.clamp_max


def _kernel_scratch_acc(x_ref, w_ref, p_ref, o_ref, acc_ref):
    """Non-f32 output: f32 VMEM accumulator, cast on finalize."""
    k = pl.program_id(2)

    @pl.when(k == 0)
    def _():
        acc_ref[...] = jnp.zeros_like(acc_ref)

    acc_ref[...] += jnp.dot(x_ref[...], w_ref[...], preferred_element_type=jnp.float32)

    @pl.when(k == pl.num_programs(2) - 1)
    def _():
        y = acc_ref[...] + p_ref[0:1, :]
        y = jnp.maximum(y, p_ref[1:2, :])
        y = jnp.minimum(y, p_ref[2:3, :])
        o_ref[...] = y.astype(o_ref.dtype)


# ----------------------------------------------------------------------------
# Wrappers
# ----------------------------------------------------------------------------
def prepare_linear_clamp(w, b, min_value, max_value, *, tn=512, tk=1024,
                         mxu_dtype=None):
    """One-time weight/param preparation (hoist out of the per-call hot path).

    Pads/casts the weight and fuses bias / clamp-min / clamp-max into a single
    (3, Np) f32 slab (one DMA, one double-buffered VMEM tile per output tile).
    """
    K, N = w.shape
    # The PyTorch module clamps with (1, in_features) bounds against a
    # (batch, out_features) output: only broadcastable when K == N.
    assert K == N, "module requires in_features == out_features"
    assert b.shape == (1, N)
    assert min_value.shape == (1, N) and max_value.shape == (1, N)

    mxu_dtype = jnp.dtype(mxu_dtype) if mxu_dtype is not None else jnp.dtype(jnp.float32)

    tn = min(tn, _round_up(N, 128))
    tk = min(tk, _round_up(K, 128))
    Np = _round_up(N, tn)
    Kp = _round_up(K, tk)

    wf = _pad2d(w, Kp, Np, mxu_dtype)

    params = jnp.zeros((3, Np), jnp.float32)
    params = params.at[0, :N].set(b[0].astype(jnp.float32))
    params = params.at[1, :N].set(min_value[0].astype(jnp.float32))
    params = params.at[2, :N].set(max_value[0].astype(jnp.float32))

    return dict(wf=wf, params=params, K=K, N=N, Kp=Kp, Np=Np, tn=tn, tk=tk,
                mxu_dtype=mxu_dtype)


def linear_clamp_prepared(x, prep, *, tm=512):
    """Run the Pallas kernel with pre-prepared weights/params."""
    B, K = x.shape
    assert K == prep["K"], "in_features mismatch"
    N, Kp, Np = prep["N"], prep["Kp"], prep["Np"]
    tn, tk = prep["tn"], prep["tk"]
    mxu_dtype = prep["mxu_dtype"]
    out_dtype = x.dtype

    tm = min(tm, _round_up(B, 8))
    Mp = _round_up(B, tm)

    # Only x needs per-call padding/cast; skipped when already aligned.
    xf = _pad2d(x, Mp, Kp, mxu_dtype)

    grid = (Mp // tm, Np // tn, Kp // tk)

    in_item = jnp.dtype(mxu_dtype).itemsize
    out_item = jnp.dtype(out_dtype).itemsize
    use_scratch = out_dtype != jnp.float32
    kernel = _kernel_scratch_acc if use_scratch else _kernel_acc_in_out
    scratch = [pltpu.VMEM((tm, tn), jnp.float32)] if use_scratch else []

    # Per-tile VMEM: double-buffered inputs + output (+ optional accumulator).
    vmem_bytes = (2 * (tm * tk + tk * tn) * in_item
                  + 2 * (3 * tn) * 4
                  + 2 * tm * tn * out_item
                  + (tm * tn * 4 if use_scratch else 0))
    # Cap at 48 MiB so the same config stays inside v7x's 64 MiB VMEM; still
    # well above v5e's 16 MiB scoped default (explicit limit is load-bearing).
    vmem_limit = int(min(48 << 20, max(32 << 20, vmem_bytes * 3 // 2)))

    cost = pl.CostEstimate(
        flops=2 * Mp * Np * Kp,
        transcendentals=0,
        bytes_accessed=(Mp * Kp + Kp * Np) * in_item + Mp * Np * out_item + 3 * Np * 4,
    )

    out = pl.pallas_call(
        kernel,
        out_shape=jax.ShapeDtypeStruct((Mp, Np), out_dtype),
        grid_spec=pltpu.PrefetchScalarGridSpec(
            num_scalar_prefetch=0,
            grid=grid,
            in_specs=[
                pl.BlockSpec((tm, tk), lambda i, j, k: (i, k)),
                pl.BlockSpec((tk, tn), lambda i, j, k: (k, j)),
                pl.BlockSpec((3, tn), lambda i, j, k: (0, j)),
            ],
            out_specs=pl.BlockSpec((tm, tn), lambda i, j, k: (i, j)),
            scratch_shapes=scratch,
        ),
        compiler_params=pltpu.CompilerParams(
            dimension_semantics=("parallel", "parallel", "arbitrary"),
            vmem_limit_bytes=vmem_limit,
        ),
        cost_estimate=cost,
    )(xf, prep["wf"], prep["params"])

    if Mp == B and Np == N:
        return out
    return out[:B, :N]


def linear_clamp(x, w, b, min_value, max_value, *, tm=512, tn=512, tk=1024,
                 mxu_dtype=None, force_kernel=False):
    """Convenience one-shot wrapper (prepare + run, with small-shape fallback)."""
    B, K = x.shape
    K2, N = w.shape
    assert K == K2, "weight in_features mismatch"
    assert K == N, "module requires in_features == out_features"

    if not force_kernel and B * K * N < (1 << 20):
        # Tiny problem: pad + kernel launch overhead dominates; fused XLA wins.
        y = x @ w + b
        return jnp.minimum(jnp.maximum(y, min_value), max_value)

    prep = prepare_linear_clamp(w, b, min_value, max_value,
                                tn=tn, tk=tk, mxu_dtype=mxu_dtype)
    return linear_clamp_prepared(x, prep, tm=tm)


if __name__ == "__main__":
    # Small shapes consistent with the module (in_features == out_features is
    # required by the original clamp broadcast).
    in_features = 32
    out_features = 32
    batch = 8

    key = jax.random.PRNGKey(0)
    kx, kw, kb, kmin, kmax = jax.random.split(key, 5)

    x = jax.random.normal(kx, (batch, in_features), dtype=jnp.float32)
    w_t = jax.random.normal(kw, (out_features, in_features), dtype=jnp.float32) * (
        1.0 / jnp.sqrt(in_features)
    )
    w = w_t.T  # (in_features, out_features)
    b = jax.random.normal(kb, (1, out_features), dtype=jnp.float32) * (
        1.0 / jnp.sqrt(in_features)
    )
    min_value = jax.random.normal(kmin, (1, in_features), dtype=jnp.float32)
    max_value = jax.random.normal(kmax, (1, in_features), dtype=jnp.float32)

    # Force the Pallas kernel path (the small-shape fallback would otherwise
    # handle this toy size in plain XLA).
    out = linear_clamp(x, w, b, min_value, max_value, force_kernel=True)
    jax.block_until_ready(out)

    # Pure-JAX reference (same clamp_min-then-clamp_max order as the module).
    ref = jnp.minimum(jnp.maximum(x @ w + b, min_value), max_value)
    assert out.shape == ref.shape
    assert jnp.allclose(out, ref, atol=2e-5, rtol=2e-5)

    # Small-shape fallback path must also match.
    out_small = linear_clamp(x, w, b, min_value, max_value)
    assert jnp.allclose(out_small, ref, atol=2e-5, rtol=2e-5)

    print("KERNEL_OK")
</pallas_src>

<mosaic_0001>
module attributes {stable_mosaic.version = 11 : i64} {
  func.func @_kernel_acc_in_out(%arg0: i32, %arg1: i32, %arg2: i32, %arg3: memref<8x128xf32, #tpu.memory_space<vmem>>, %arg4: memref<128x128xf32, #tpu.memory_space<vmem>>, %arg5: memref<3x128xf32, #tpu.memory_space<vmem>>, %arg6: memref<8x128xf32, #tpu.memory_space<vmem>>) attributes {dimension_semantics = [#tpu.dimension_semantics<parallel>, #tpu.dimension_semantics<parallel>, #tpu.dimension_semantics<arbitrary>], iteration_bounds = array<i64: 1, 1, 1>, scalar_prefetch = 0 : i64, scratch_operands = 0 : i64, tpu.core_type = #tpu.core_type<tc>, window_params = [{transform_indices = @transform_0, window_bounds = array<i64: 8, 128>}, {transform_indices = @transform_1, window_bounds = array<i64: 128, 128>}, {transform_indices = @transform_2, window_bounds = array<i64: 3, 128>}, {transform_indices = @transform_3, window_bounds = array<i64: 8, 128>}]} {
    %c0_i32 = arith.constant 0 : i32
    %0 = arith.cmpi eq, %arg2, %c0_i32 : i32
    %1 = arith.extui %0 : i1 to i32
    %c0_i32_0 = arith.constant 0 : i32
    %2 = arith.cmpi ne, %1, %c0_i32_0 : i32
    scf.if %2 {
      %cst_10 = arith.constant 0.000000e+00 : f32
      %12 = vector.broadcast %cst_10 : f32 to vector<8x128xf32>
      %c0_11 = arith.constant 0 : index
      %c0_12 = arith.constant 0 : index
      %13 = vector.load %arg6[%c0_11, %c0_12] : memref<8x128xf32, #tpu.memory_space<vmem>>, vector<8x128xf32>
      tpu.vector_store %arg6[%c0_11, %c0_12], %12 {strides = array<i32>} : memref<8x128xf32, #tpu.memory_space<vmem>>, vector<8x128xf32>,
    } else {
    }
    %c0 = arith.constant 0 : index
    %c0_1 = arith.constant 0 : index
    %3 = vector.load %arg6[%c0, %c0_1] : memref<8x128xf32, #tpu.memory_space<vmem>>, vector<8x128xf32>
    %c0_2 = arith.constant 0 : index
    %c0_3 = arith.constant 0 : index
    %4 = vector.load %arg3[%c0_2, %c0_3] : memref<8x128xf32, #tpu.memory_space<vmem>>, vector<8x128xf32>
    %c0_4 = arith.constant 0 : index
    %c0_5 = arith.constant 0 : index
    %5 = vector.load %arg4[%c0_4, %c0_5] : memref<128x128xf32, #tpu.memory_space<vmem>>, vector<128x128xf32>
    %cst = arith.constant dense<0.000000e+00> : vector<8x128xf32>
    %6 = tpu.matmul %4, %5, %cst {dimension_numbers = #tpu.dot_dimension_numbers<[1], [0], [0], [1], [0, 0, 1, 1], [], []>} : vector<8x128xf32>, vector<128x128xf32>, vector<8x128xf32> -> vector<8x128xf32>
    %7 = arith.addf %3, %6 : vector<8x128xf32>
    %c0_6 = arith.constant 0 : index
    %c0_7 = arith.constant 0 : index
    %8 = vector.load %arg6[%c0_6, %c0_7] : memref<8x128xf32, #tpu.memory_space<vmem>>, vector<8x128xf32>
    tpu.vector_store %arg6[%c0_6, %c0_7], %7 {strides = array<i32>} : memref<8x128xf32, #tpu.memory_space<vmem>>, vector<8x128xf32>,
    %c0_i32_8 = arith.constant 0 : i32
    %9 = arith.cmpi eq, %arg2, %c0_i32_8 : i32
    %10 = arith.extui %9 : i1 to i32
    %c0_i32_9 = arith.constant 0 : i32
    %11 = arith.cmpi ne, %10, %c0_i32_9 : i32
    scf.if %11 {
      %c0_10 = arith.constant 0 : index
      %c0_11 = arith.constant 0 : index
      %12 = vector.load %arg6[%c0_10, %c0_11] : memref<8x128xf32, #tpu.memory_space<vmem>>, vector<8x128xf32>
      %c0_12 = arith.constant 0 : index
      %c0_13 = arith.constant 0 : index
      %13 = vector.load %arg5[%c0_12, %c0_13] : memref<3x128xf32, #tpu.memory_space<vmem>>, vector<1x128xf32>
      %14 = vector.broadcast %13 : vector<1x128xf32> to vector<8x128xf32>
      %15 = arith.addf %12, %14 : vector<8x128xf32>
      %c1 = arith.constant 1 : index
      %c0_14 = arith.constant 0 : index
      %16 = vector.load %arg5[%c1, %c0_14] : memref<3x128xf32, #tpu.memory_space<vmem>>, vector<1x128xf32>
      %17 = vector.broadcast %16 : vector<1x128xf32> to vector<8x128xf32>
      %18 = arith.maximumf %15, %17 : vector<8x128xf32>
      %c2 = arith.constant 2 : index
      %c0_15 = arith.constant 0 : index
      %19 = vector.load %arg5[%c2, %c0_15] : memref<3x128xf32, #tpu.memory_space<vmem>>, vector<1x128xf32>
      %20 = vector.broadcast %19 : vector<1x128xf32> to vector<8x128xf32>
      %21 = arith.minimumf %18, %20 : vector<8x128xf32>
      %c0_16 = arith.constant 0 : index
      %c0_17 = arith.constant 0 : index
      %22 = vector.load %arg6[%c0_16, %c0_17] : memref<8x128xf32, #tpu.memory_space<vmem>>, vector<8x128xf32>
      tpu.vector_store %arg6[%c0_16, %c0_17], %21 {strides = array<i32>} : memref<8x128xf32, #tpu.memory_space<vmem>>, vector<8x128xf32>,
    } else {
    }
    return
  }
  func.func @transform_0(%arg0: i32, %arg1: i32, %arg2: i32) -> (i32, i32) {
    %c0_i32 = arith.constant 0 : i32
    return %arg0, %arg2 : i32, i32
  }
  func.func @transform_1(%arg0: i32, %arg1: i32, %arg2: i32) -> (i32, i32) {
    %c0_i32 = arith.constant 0 : i32
    return %arg2, %arg1 : i32, i32
  }
  func.func @transform_2(%arg0: i32, %arg1: i32, %arg2: i32) -> (i32, i32) {
    %c0_i32 = arith.constant 0 : i32
    %c0_i32_0 = arith.constant 0 : i32
    return %c0_i32, %arg1 : i32, i32
  }
  func.func @transform_3(%arg0: i32, %arg1: i32, %arg2: i32) -> (i32, i32) {
    %c0_i32 = arith.constant 0 : i32
    return %arg0, %arg1 : i32, i32
  }
}

</mosaic_0001>

<llo_original>
// kernel: tpu_custom_call.1
$region0: #{tpu_custom_call.1}
  #allocation0 [shape = 'u32[]', space=smem, size = 0x4, offset = 0x4, fixed_abs, tag = 'smem constant byte address 0x4 - core index']
  #allocation1 [shape = 'u32[144,128]{1,0:T(1,128)}', space=vmem, size = 0x12000, scoped, tag = 'internal scratch']
  %s0 = inlined_call_operand.hbm [shape: f32[8,128], index: 0, kind: input, shape index: {}]
  %s1 = inlined_call_operand.hbm [shape: f32[128,128], index: 1, kind: input, shape index: {}]
  %s2 = inlined_call_operand.vmem [shape: f32[3,128], index: 2, kind: input, shape index: {}]
  %s3 = inlined_call_operand.hbm [shape: f32[8,128], index: 3, kind: output, shape index: {}]
  %s4 = sld [smem:[#allocation0]]
  $region38: #{tpu_custom_call.1} parent=0
    _
  %s6 = ssub.s32 1, %s4
  %s7 = scalar_select 0, %s6, %s4
  $region1: #{tpu_custom_call.1} parent=0
    #allocation2 [shape = 'u8[4096]{0}', space=vmem, size = 0x1000, scoped, tag = 'input window, operand 0, single buffered']
    #allocation3 [shape = 's32[1]{0}', space=sflag, size = 0x4, scoped, tag = 'scoped memory for tpu_custom_call.1']
    #allocation4 [shape = 's32[1]{0}', space=sflag, size = 0x4, scoped, tag = 'scoped memory for tpu_custom_call.1']
    #allocation5 [shape = 'u8[65536]{0}', space=vmem, size = 0x10000, scoped, tag = 'input window, operand 1, single buffered']
    #allocation6 [shape = 's32[1]{0}', space=sflag, size = 0x4, scoped, tag = 'scoped memory for tpu_custom_call.1']
    #allocation7 [shape = 'u8[4096]{0}', space=vmem, size = 0x1000, scoped, tag = 'output window, operand 0, single buffered']
    %8 = vsyncpa [#allocation3], 0
    %9 = vsyncpa [#allocation6], 0
    %10 = vsyncpa [#allocation4], 0
    // Predicated region
    $region2: #{tpu_custom_call.1} parent=1 // pred_check
      _
    $region3: #{tpu_custom_call.1} parent=1 // pred_check_branch
      %12 = sbr.rel (0) target = $region5
    $region4: #{tpu_custom_call.1} parent=1 // pred_region
      %s14 = ssub.s32 128, 128
      %15 = vsyncadd [#allocation3], %s14
      %s17 = sshll.u32 [#allocation2], 4
      %s18 = int_to_ptr.vmem [resolvable:$true] %s17
      %20 = dma.hbm_to_vmem [thread:$0]  %s0, 128, %s18, [#allocation3]
    $region5: #{tpu_custom_call.1} parent=1 // pred_fallthru
      _
    // Predicated region
    $region6: #{tpu_custom_call.1} parent=1 // pred_check
      _
    $region7: #{tpu_custom_call.1} parent=1 // pred_check_branch
      %22 = sbr.rel (0) target = $region9
    $region8: #{tpu_custom_call.1} parent=1 // pred_region
      %s24 = ssub.s32 2048, 2048
      %25 = vsyncadd [#allocation6], %s24
      %s26 = sshll.u32 [#allocation5], 4
      %s27 = int_to_ptr.vmem [resolvable:$true] %s26
      %32 = dma.hbm_to_vmem [thread:$0]  %s1, 2048, %s27, [#allocation6], 128, 128, 8
    $region9: #{tpu_custom_call.1} parent=1 // pred_fallthru
      _
    // Predicated region
    $region10: #{tpu_custom_call.1} parent=1 // pred_check
      _
    $region11: #{tpu_custom_call.1} parent=1 // pred_check_branch
      %34 = sbr.rel (0) target = $region13
    $region12: #{tpu_custom_call.1} parent=1 // pred_region
      _
    $region13: #{tpu_custom_call.1} parent=1 // pred_fallthru
      _
    // Predicated region
    $region14: #{tpu_custom_call.1} parent=1 // pred_check
      _
    $region15: #{tpu_custom_call.1} parent=1 // pred_check_branch
      %36 = sbr.rel (0) target = $region17
    $region16: #{tpu_custom_call.1} parent=1 // pred_region
      %37 = dma.done [#allocation3], 128
    $region17: #{tpu_custom_call.1} parent=1 // pred_fallthru
      _
    // Predicated region
    $region18: #{tpu_custom_call.1} parent=1 // pred_check
      _
    $region19: #{tpu_custom_call.1} parent=1 // pred_check_branch
      %39 = sbr.rel (0) target = $region21
    $region20: #{tpu_custom_call.1} parent=1 // pred_region
      %40 = dma.done [#allocation6], 2048
    $region21: #{tpu_custom_call.1} parent=1 // pred_fallthru
      _
    %p41 = scmp.eq.s32.totalorder 0, 0
    // Predicated region
    $region22: #{tpu_custom_call.1} parent=1 // pred_check
      %p42 = pneg %p41
    $region23: #{tpu_custom_call.1} parent=1 // pred_check_branch
      %44 = sbr.rel (%p42) target = $region25
    $region24: #{tpu_custom_call.1} parent=1 // pred_region
      %45 = vst [vmem:[#allocation7] sm:$0xff] 0.0
    $region25: #{tpu_custom_call.1} parent=1 // pred_fallthru
      _
    %v46 = vld [vmem:[#allocation7] sm:$0xff]
    %v47 = vld [vmem:[#allocation2] sm:$0xff]
    %v48 = vld [vmem:[#allocation5] sm:$0xff]
    %v49 = vld [vmem:[#allocation5 + $0x8] sm:$0xff]
    %v50 = vld [vmem:[#allocation5 + $0x10] sm:$0xff]
    %v51 = vld [vmem:[#allocation5 + $0x18] sm:$0xff]
    %v52 = vld [vmem:[#allocation5 + $0x20] sm:$0xff]
    %v53 = vld [vmem:[#allocation5 + $0x28] sm:$0xff]
    %v54 = vld [vmem:[#allocation5 + $0x30] sm:$0xff]
    %v55 = vld [vmem:[#allocation5 + $0x38] sm:$0xff]
    %v56 = vld [vmem:[#allocation5 + $0x40] sm:$0xff]
    %v57 = vld [vmem:[#allocation5 + $0x48] sm:$0xff]
    %v58 = vld [vmem:[#allocation5 + $0x50] sm:$0xff]
    %v59 = vld [vmem:[#allocation5 + $0x58] sm:$0xff]
    %v60 = vld [vmem:[#allocation5 + $0x60] sm:$0xff]
    %v61 = vld [vmem:[#allocation5 + $0x68] sm:$0xff]
    %v62 = vld [vmem:[#allocation5 + $0x70] sm:$0xff]
    %v63 = vld [vmem:[#allocation5 + $0x78] sm:$0xff]
    %64 = vmatprep.subr.mxu0 0.0
    %65 = vmatpush1.msra.mxu0 %v48
    %66 = vmatprep.subr.mxu0 0.0
    %67 = vmatpush1.msra.mxu0 %v49
    %68 = vmatprep.subr.mxu0 0.0
    %69 = vmatpush1.msra.mxu0 %v50
    %70 = vmatprep.subr.mxu0 0.0
    %71 = vmatpush1.msra.mxu0 %v51
    %72 = vmatprep.subr.mxu0 0.0
    %73 = vmatpush1.msra.mxu0 %v52
    %74 = vmatprep.subr.mxu0 0.0
    %75 = vmatpush1.msra.mxu0 %v53
    %76 = vmatprep.subr.mxu0 0.0
    %77 = vmatpush1.msra.mxu0 %v54
    %78 = vmatprep.subr.mxu0 0.0
    %79 = vmatpush1.msra.mxu0 %v55
    %80 = vmatprep.subr.mxu0 0.0
    %81 = vmatpush1.msra.mxu0 %v56
    %82 = vmatprep.subr.mxu0 0.0
    %83 = vmatpush1.msra.mxu0 %v57
    %84 = vmatprep.subr.mxu0 0.0
    %85 = vmatpush1.msra.mxu0 %v58
    %86 = vmatprep.subr.mxu0 0.0
    %87 = vmatpush1.msra.mxu0 %v59
    %88 = vmatprep.subr.mxu0 0.0
    %89 = vmatpush1.msra.mxu0 %v60
    %90 = vmatprep.subr.mxu0 0.0
    %91 = vmatpush1.msra.mxu0 %v61
    %92 = vmatprep.subr.mxu0 0.0
    %93 = vmatpush1.msra.mxu0 %v62
    %94 = vmatprep.subr.mxu0 0.0
    %95 = vmatpush1.msra.mxu0 %v63
    %96 = vmatprep.subr.mxu0 0.0
    %97 = vmatpush1.msra.mxu0 0.0
    %98 = vmatprep.subr.mxu0 0.0
    %99 = vmatpush1.msra.mxu0 0.0
    %100 = vmatprep.subr.mxu0 0.0
    %101 = vmatpush1.msra.mxu0 0.0
    %102 = vmatprep.subr.mxu0 0.0
    %103 = vmatpush1.msra.mxu0 0.0
    %104 = vmatprep.subr.mxu0 0.0
    %105 = vmatpush1.msra.mxu0 0.0
    %106 = vmatprep.subr.mxu0 0.0
    %107 = vmatpush1.msra.mxu0 0.0
    %108 = vmatprep.subr.mxu0 0.0
    %109 = vmatpush1.msra.mxu0 0.0
    %110 = vmatprep.subr.mxu0 0.0
    %111 = vmatpush1.msra.mxu0 0.0
    %112 = vmatprep.subr.mxu0 0.0
    %113 = vmatpush1.msra.mxu0 0.0
    %114 = vmatprep.subr.mxu0 0.0
    %115 = vmatpush1.msra.mxu0 0.0
    %116 = vmatprep.subr.mxu0 0.0
    %117 = vmatpush1.msra.mxu0 0.0
    %118 = vmatprep.subr.mxu0 0.0
    %119 = vmatpush1.msra.mxu0 0.0
    %120 = vmatprep.subr.mxu0 0.0
    %121 = vmatpush1.msra.mxu0 0.0
    %122 = vmatprep.subr.mxu0 0.0
    %123 = vmatpush1.msra.mxu0 0.0
    %124 = vmatprep.subr.mxu0 0.0
    %125 = vmatpush1.msra.mxu0 0.0
    %126 = vmatprep.subr.mxu0 0.0
    %127 = vmatpush1.msra.mxu0 0.0
    %128 = vmatprep.mubr.f32.mxu0 0.0
    %129 = vmatmul.mubr.f32.gmra.mrb[0].mxu0 %v47
    %v130 = vpop.f32.mrb[0].mxu0
    %v131 = vadd.f32 0.0, %v130
    %v132 = vpop.f32.mrb[0].mxu0
    %133 = vdwg.mxu0
    %v134 = vadd.f32 %v46, %v131
    %135 = vst [vmem:[#allocation7] sm:$0xff] %v134
    // Predicated region
    $region26: #{tpu_custom_call.1} parent=1 // pred_check
      %p136 = pneg %p41
    $region27: #{tpu_custom_call.1} parent=1 // pred_check_branch
      %138 = sbr.rel (%p136) target = $region29
    $region28: #{tpu_custom_call.1} parent=1 // pred_region
      %v139 = vld [vmem:[#allocation7] sm:$0xff]
      %v140 = vld [vmem:[%s2] sm:$0x1]
      %v141 = vlaneseq
      %v142 = vshrl.u32 %v141, 7
      %v143 = vsub.s32 0, %v142
      %v144 = vrot.slane %v140, %v143
      %v145 = vadd.f32 %v139, %v144
      %v146 = vld [vmem:[%s2 + $0x1] sm:$0x1]
      %v147 = vlaneseq
      %v148 = vshrl.u32 %v147, 7
      %v149 = vsub.s32 0, %v148
      %v150 = vrot.slane %v146, %v149
      %v151 = vmax.f32 %v145, %v150
      %v152 = vld [vmem:[%s2 + $0x2] sm:$0x1]
      %v153 = vlaneseq
      %v154 = vshrl.u32 %v153, 7
      %v155 = vsub.s32 0, %v154
      %v156 = vrot.slane %v152, %v155
      %v157 = vmin.f32 %v151, %v156
      %158 = vst [vmem:[#allocation7] sm:$0xff] %v157
    $region29: #{tpu_custom_call.1} parent=1 // pred_fallthru
      _
    // Predicated region
    $region30: #{tpu_custom_call.1} parent=1 // pred_check
      _
    $region31: #{tpu_custom_call.1} parent=1 // pred_check_branch
      %160 = sbr.rel (0) target = $region33
    $region32: #{tpu_custom_call.1} parent=1 // pred_region
      %s162 = ssub.s32 128, 128
      %163 = vsyncadd [#allocation4], %s162
      %s165 = sshll.u32 [#allocation7], 4
      %s166 = int_to_ptr.vmem [resolvable:$true] %s165
      %168 = dma.vmem_to_hbm [thread:$0]  %s166, 128, %s3, [#allocation4]
    $region33: #{tpu_custom_call.1} parent=1 // pred_fallthru
      _
    // Predicated region
    $region34: #{tpu_custom_call.1} parent=1 // pred_check
      _
    $region35: #{tpu_custom_call.1} parent=1 // pred_check_branch
      %170 = sbr.rel (0) target = $region37
    $region36: #{tpu_custom_call.1} parent=1 // pred_region
      %171 = dma.done [#allocation4], 128
    $region37: #{tpu_custom_call.1} parent=1 // pred_fallthru
      _
    %172 = vsyncpa [#allocation3], 1
    %173 = vsyncpa [#allocation6], 1
    %174 = vsyncpa [#allocation4], 1

</llo_original>
